<compile_context>
chip_gen: v5e
topology: v5e:2x2
jax: 0.10.0
libtpu: 0.0.40
codegen_flags: <defaults>
</compile_context>

<pallas_src>
import functools

import jax
import jax.numpy as jnp
from jax.experimental import pallas as pl
from jax.experimental.pallas import tpu as pltpu

# Synthetic arglist (shapes implied by the module's __init__)
NN_INPUT_SIZE = 32
NN_HIDDEN_SIZE = 64
NN_OUTPUT_SIZE = 16

# Fixed large batch tile (rows per grid step). Multiple of 8 sublanes; with these feature sizes a
# 4096-row tile uses only a few MiB of VMEM even double-buffered, well under v7x's 64 MiB.
DEFAULT_TILE_B = 4096


def _round_up(x, m):
    return ((x + m - 1) // m) * m


def _mlp_kernel(x_ref, w1_ref, b1_ref, w2_ref, b2_ref, w3_ref, b3_ref, o_ref, h_ref):
    """Fused hot path: (matmul -> bias -> relu) x2, then final matmul + bias.

    Dots run on the MXU in the streaming dtype (bf16 by default) with f32 accumulation.
    Bias-add / ReLU are done in f32 on the VPU. The hidden activation is kept in an explicit
    f32 VMEM scratch (h_ref) so large batch tiles don't depend on compiler-chosen temporaries.
    """
    dot_dtype = w1_ref.dtype

    x = x_ref[...]
    h = jnp.dot(x, w1_ref[...], preferred_element_type=jnp.float32) + b1_ref[...]
    h_ref[...] = jnp.maximum(h, 0.0)

    h = jnp.dot(h_ref[...].astype(dot_dtype), w2_ref[...],
                preferred_element_type=jnp.float32) + b2_ref[...]
    h_ref[...] = jnp.maximum(h, 0.0)

    o = jnp.dot(h_ref[...].astype(dot_dtype), w3_ref[...],
                preferred_element_type=jnp.float32) + b3_ref[...]
    o_ref[...] = o.astype(o_ref.dtype)


@functools.partial(jax.jit, static_argnames=("tile_b", "dot_dtype"))
def classification_model_forward(x, params, *, tile_b=DEFAULT_TILE_B, dot_dtype=jnp.bfloat16):
    """x: (B, NN_INPUT_SIZE). params: dict of w1,b1,w2,b2,w3,b3 (weights stored (in, out))."""
    B, D_in = x.shape
    out_dtype = x.dtype

    w1, b1 = params["w1"], params["b1"]   # (D_in, H), (1, H)
    w2, b2 = params["w2"], params["b2"]   # (H, H),    (1, H)
    w3, b3 = params["w3"], params["b3"]   # (H, D_out),(1, D_out)
    H = w1.shape[1]
    D_out = w3.shape[1]

    # Fixed, sublane-aligned batch tile. Never default to B: keeps VMEM bounded for large B and
    # guarantees a real grid so the "parallel" axis can be sharded across TensorCores.
    tb = min(int(tile_b), _round_up(B, 8))
    tb = max(8, _round_up(tb, 8))
    grid = (pl.cdiv(B, tb),)
    # If tb does not divide B, the last tile is edge-padded by Pallas; padded rows feed the matmul
    # with don't-care data but are masked on the HBM writeback, so the result stays correct.

    # Stream x and the weights in bf16 (f32 accumulate inside the kernel). Biases stay f32.
    # In a real pipeline the x cast fuses with the producer; weights are cast once and reused.
    x_c = x.astype(dot_dtype)
    w1c = w1.astype(dot_dtype)
    w2c = w2.astype(dot_dtype)
    w3c = w3.astype(dot_dtype)
    b1c = b1.astype(jnp.float32)
    b2c = b2.astype(jnp.float32)
    b3c = b3.astype(jnp.float32)

    in_itemsize = jnp.dtype(dot_dtype).itemsize
    out_itemsize = jnp.dtype(out_dtype).itemsize
    weight_bytes = (D_in * H + H * H + H * D_out) * in_itemsize + (2 * H + D_out) * 4

    # Scoped-VMEM budget derived from the actual tiles (double-buffered in/out + scratch + weights),
    # with 2x headroom; floor 16 MiB, cap 48 MiB (safe on v7x's 64 MiB physical VMEM per TC).
    vmem_need = (2 * tb * D_in * in_itemsize      # double-buffered x tile
                 + 2 * tb * D_out * out_itemsize  # double-buffered out tile
                 + tb * H * 4                     # h scratch (f32)
                 + 2 * weight_bytes)              # resident weights/biases
    vmem_limit = int(min(max(2 * vmem_need, 16 * 1024 * 1024), 48 * 1024 * 1024))

    cost = pl.CostEstimate(
        flops=2 * B * (D_in * H + H * H + H * D_out),
        transcendentals=0,
        bytes_accessed=B * D_in * in_itemsize + B * D_out * out_itemsize + weight_bytes,
    )

    return pl.pallas_call(
        _mlp_kernel,
        out_shape=jax.ShapeDtypeStruct((B, D_out), out_dtype),
        grid_spec=pltpu.PrefetchScalarGridSpec(
            num_scalar_prefetch=0,
            grid=grid,
            in_specs=[
                pl.BlockSpec((tb, D_in), lambda i: (i, 0)),   # x tile over batch
                pl.BlockSpec((D_in, H), lambda i: (0, 0)),    # w1 (resident across grid)
                pl.BlockSpec((1, H), lambda i: (0, 0)),       # b1
                pl.BlockSpec((H, H), lambda i: (0, 0)),       # w2
                pl.BlockSpec((1, H), lambda i: (0, 0)),       # b2
                pl.BlockSpec((H, D_out), lambda i: (0, 0)),   # w3
                pl.BlockSpec((1, D_out), lambda i: (0, 0)),   # b3
            ],
            out_specs=pl.BlockSpec((tb, D_out), lambda i: (i, 0)),
            scratch_shapes=[pltpu.VMEM((tb, H), jnp.float32)],  # hidden activation
        ),
        compiler_params=pltpu.CompilerParams(
            dimension_semantics=("parallel",),
            vmem_limit_bytes=vmem_limit,
        ),
        cost_estimate=cost,
    )(x_c, w1c, b1c, w2c, b2c, w3c, b3c)


def init_params(key):
    """Deterministic init mimicking nn.Linear (uniform +/- 1/sqrt(fan_in)).
    Weights stored pre-transposed as (in, out)."""
    k1, k2, k3, k4, k5, k6 = jax.random.split(key, 6)

    def linear(kw, kb, fan_in, fan_out):
        bound = 1.0 / (fan_in ** 0.5)
        w = jax.random.uniform(kw, (fan_in, fan_out), jnp.float32, -bound, bound)
        b = jax.random.uniform(kb, (1, fan_out), jnp.float32, -bound, bound)
        return w, b

    w1, b1 = linear(k1, k2, NN_INPUT_SIZE, NN_HIDDEN_SIZE)
    w2, b2 = linear(k3, k4, NN_HIDDEN_SIZE, NN_HIDDEN_SIZE)
    w3, b3 = linear(k5, k6, NN_HIDDEN_SIZE, NN_OUTPUT_SIZE)
    return {"w1": w1, "b1": b1, "w2": w2, "b2": b2, "w3": w3, "b3": b3}


def _ref_forward(x, p, dot_dtype=jnp.bfloat16):
    """Pure-JAX reference mirroring the kernel's precision (bf16 operands, f32 accumulate)."""
    def q(a):
        return a.astype(dot_dtype).astype(jnp.float32)

    h = jnp.maximum(q(x) @ q(p["w1"]) + p["b1"], 0.0)
    h = jnp.maximum(q(h) @ q(p["w2"]) + p["b2"], 0.0)
    return q(h) @ q(p["w3"]) + p["b3"]


if __name__ == "__main__":
    key = jax.random.PRNGKey(0)
    kx, kp = jax.random.split(key)
    params = init_params(kp)

    # Case 1: tiny batch (single grid step, tile clamped to round_up(B, 8)).
    B1 = 8
    x1 = jax.random.normal(kx, (B1, NN_INPUT_SIZE), dtype=jnp.float32)
    out1 = jax.block_until_ready(classification_model_forward(x1, params))
    ref1 = _ref_forward(x1, params)
    assert out1.shape == (B1, NN_OUTPUT_SIZE)
    assert jnp.allclose(out1, ref1, atol=2e-2, rtol=2e-2)

    # Case 2: multi-step grid with a non-divisible edge tile (B=120, tile_b=32 -> grid=(4,)).
    B2 = 120
    x2 = jax.random.normal(jax.random.fold_in(kx, 1), (B2, NN_INPUT_SIZE), dtype=jnp.float32)
    out2 = jax.block_until_ready(classification_model_forward(x2, params, tile_b=32))
    ref2 = _ref_forward(x2, params)
    assert out2.shape == (B2, NN_OUTPUT_SIZE)
    assert jnp.allclose(out2, ref2, atol=2e-2, rtol=2e-2)

    print("KERNEL_OK")
</pallas_src>

<mosaic_0001>
module attributes {stable_mosaic.version = 11 : i64} {
  func.func @_mlp_kernel(%arg0: i32, %arg1: memref<8x32xbf16, #tpu.memory_space<vmem>>, %arg2: memref<32x64xbf16, #tpu.memory_space<vmem>>, %arg3: memref<1x64xf32, #tpu.memory_space<vmem>>, %arg4: memref<64x64xbf16, #tpu.memory_space<vmem>>, %arg5: memref<1x64xf32, #tpu.memory_space<vmem>>, %arg6: memref<64x16xbf16, #tpu.memory_space<vmem>>, %arg7: memref<1x16xf32, #tpu.memory_space<vmem>>, %arg8: memref<8x16xf32, #tpu.memory_space<vmem>>, %arg9: memref<8x64xf32, #tpu.memory_space<vmem>>) attributes {dimension_semantics = [#tpu.dimension_semantics<parallel>], iteration_bounds = array<i64: 1>, scalar_prefetch = 0 : i64, scratch_operands = 1 : i64, tpu.core_type = #tpu.core_type<tc>, window_params = [{transform_indices = @transform_0, window_bounds = array<i64: 8, 32>}, {pipeline_mode = #tpu.pipeline_mode<synchronous>, transform_indices = @transform_1, window_bounds = array<i64: 32, 64>}, {pipeline_mode = #tpu.pipeline_mode<synchronous>, transform_indices = @transform_2, window_bounds = array<i64: 1, 64>}, {pipeline_mode = #tpu.pipeline_mode<synchronous>, transform_indices = @transform_3, window_bounds = array<i64: 64, 64>}, {pipeline_mode = #tpu.pipeline_mode<synchronous>, transform_indices = @transform_4, window_bounds = array<i64: 1, 64>}, {pipeline_mode = #tpu.pipeline_mode<synchronous>, transform_indices = @transform_5, window_bounds = array<i64: 64, 16>}, {pipeline_mode = #tpu.pipeline_mode<synchronous>, transform_indices = @transform_6, window_bounds = array<i64: 1, 16>}, {transform_indices = @transform_7, window_bounds = array<i64: 8, 16>}]} {
    %c0 = arith.constant 0 : index
    %c0_0 = arith.constant 0 : index
    %0 = vector.load %arg1[%c0, %c0_0] : memref<8x32xbf16, #tpu.memory_space<vmem>>, vector<8x32xbf16>
    %c0_1 = arith.constant 0 : index
    %c0_2 = arith.constant 0 : index
    %1 = vector.load %arg2[%c0_1, %c0_2] : memref<32x64xbf16, #tpu.memory_space<vmem>>, vector<32x64xbf16>
    %cst = arith.constant dense<0.000000e+00> : vector<8x64xf32>
    %2 = tpu.matmul %0, %1, %cst {dimension_numbers = #tpu.dot_dimension_numbers<[1], [0], [0], [1], [0, 0, 1, 1], [], []>} : vector<8x32xbf16>, vector<32x64xbf16>, vector<8x64xf32> -> vector<8x64xf32>
    %c0_3 = arith.constant 0 : index
    %c0_4 = arith.constant 0 : index
    %3 = vector.load %arg3[%c0_3, %c0_4] : memref<1x64xf32, #tpu.memory_space<vmem>>, vector<1x64xf32>
    %4 = vector.broadcast %3 : vector<1x64xf32> to vector<8x64xf32>
    %5 = arith.addf %2, %4 : vector<8x64xf32>
    %cst_5 = arith.constant 0.000000e+00 : f32
    %6 = vector.broadcast %cst_5 : f32 to vector<8x64xf32>
    %7 = arith.maximumf %5, %6 : vector<8x64xf32>
    %c0_6 = arith.constant 0 : index
    %c0_7 = arith.constant 0 : index
    %8 = vector.load %arg9[%c0_6, %c0_7] : memref<8x64xf32, #tpu.memory_space<vmem>>, vector<8x64xf32>
    tpu.vector_store %arg9[%c0_6, %c0_7], %7 {strides = array<i32>} : memref<8x64xf32, #tpu.memory_space<vmem>>, vector<8x64xf32>,
    %c0_8 = arith.constant 0 : index
    %c0_9 = arith.constant 0 : index
    %9 = vector.load %arg9[%c0_8, %c0_9] : memref<8x64xf32, #tpu.memory_space<vmem>>, vector<8x64xf32>
    %10 = arith.truncf %9 : vector<8x64xf32> to vector<8x64xbf16>
    %c0_10 = arith.constant 0 : index
    %c0_11 = arith.constant 0 : index
    %11 = vector.load %arg4[%c0_10, %c0_11] : memref<64x64xbf16, #tpu.memory_space<vmem>>, vector<64x64xbf16>
    %cst_12 = arith.constant dense<0.000000e+00> : vector<8x64xf32>
    %12 = tpu.matmul %10, %11, %cst_12 {dimension_numbers = #tpu.dot_dimension_numbers<[1], [0], [0], [1], [0, 0, 1, 1], [], []>} : vector<8x64xbf16>, vector<64x64xbf16>, vector<8x64xf32> -> vector<8x64xf32>
    %c0_13 = arith.constant 0 : index
    %c0_14 = arith.constant 0 : index
    %13 = vector.load %arg5[%c0_13, %c0_14] : memref<1x64xf32, #tpu.memory_space<vmem>>, vector<1x64xf32>
    %14 = vector.broadcast %13 : vector<1x64xf32> to vector<8x64xf32>
    %15 = arith.addf %12, %14 : vector<8x64xf32>
    %cst_15 = arith.constant 0.000000e+00 : f32
    %16 = vector.broadcast %cst_15 : f32 to vector<8x64xf32>
    %17 = arith.maximumf %15, %16 : vector<8x64xf32>
    %c0_16 = arith.constant 0 : index
    %c0_17 = arith.constant 0 : index
    %18 = vector.load %arg9[%c0_16, %c0_17] : memref<8x64xf32, #tpu.memory_space<vmem>>, vector<8x64xf32>
    tpu.vector_store %arg9[%c0_16, %c0_17], %17 {strides = array<i32>} : memref<8x64xf32, #tpu.memory_space<vmem>>, vector<8x64xf32>,
    %c0_18 = arith.constant 0 : index
    %c0_19 = arith.constant 0 : index
    %19 = vector.load %arg9[%c0_18, %c0_19] : memref<8x64xf32, #tpu.memory_space<vmem>>, vector<8x64xf32>
    %20 = arith.truncf %19 : vector<8x64xf32> to vector<8x64xbf16>
    %c0_20 = arith.constant 0 : index
    %c0_21 = arith.constant 0 : index
    %21 = vector.load %arg6[%c0_20, %c0_21] : memref<64x16xbf16, #tpu.memory_space<vmem>>, vector<64x16xbf16>
    %cst_22 = arith.constant dense<0.000000e+00> : vector<8x16xf32>
    %22 = tpu.matmul %20, %21, %cst_22 {dimension_numbers = #tpu.dot_dimension_numbers<[1], [0], [0], [1], [0, 0, 1, 1], [], []>} : vector<8x64xbf16>, vector<64x16xbf16>, vector<8x16xf32> -> vector<8x16xf32>
    %c0_23 = arith.constant 0 : index
    %c0_24 = arith.constant 0 : index
    %23 = vector.load %arg7[%c0_23, %c0_24] : memref<1x16xf32, #tpu.memory_space<vmem>>, vector<1x16xf32>
    %24 = vector.broadcast %23 : vector<1x16xf32> to vector<8x16xf32>
    %25 = arith.addf %22, %24 : vector<8x16xf32>
    %c0_25 = arith.constant 0 : index
    %c0_26 = arith.constant 0 : index
    %26 = vector.load %arg8[%c0_25, %c0_26] : memref<8x16xf32, #tpu.memory_space<vmem>>, vector<8x16xf32>
    tpu.vector_store %arg8[%c0_25, %c0_26], %25 {strides = array<i32>} : memref<8x16xf32, #tpu.memory_space<vmem>>, vector<8x16xf32>,
    return
  }
  func.func @transform_0(%arg0: i32) -> (i32, i32) {
    %c0_i32 = arith.constant 0 : i32
    %c0_i32_0 = arith.constant 0 : i32
    return %arg0, %c0_i32 : i32, i32
  }
  func.func @transform_1(%arg0: i32) -> (i32, i32) {
    %c0_i32 = arith.constant 0 : i32
    %c0_i32_0 = arith.constant 0 : i32
    %c0_i32_1 = arith.constant 0 : i32
    return %c0_i32, %c0_i32_0 : i32, i32
  }
  func.func @transform_2(%arg0: i32) -> (i32, i32) {
    %c0_i32 = arith.constant 0 : i32
    %c0_i32_0 = arith.constant 0 : i32
    %c0_i32_1 = arith.constant 0 : i32
    return %c0_i32, %c0_i32_0 : i32, i32
  }
  func.func @transform_3(%arg0: i32) -> (i32, i32) {
    %c0_i32 = arith.constant 0 : i32
    %c0_i32_0 = arith.constant 0 : i32
    %c0_i32_1 = arith.constant 0 : i32
    return %c0_i32, %c0_i32_0 : i32, i32
  }
  func.func @transform_4(%arg0: i32) -> (i32, i32) {
    %c0_i32 = arith.constant 0 : i32
    %c0_i32_0 = arith.constant 0 : i32
    %c0_i32_1 = arith.constant 0 : i32
    return %c0_i32, %c0_i32_0 : i32, i32
  }
  func.func @transform_5(%arg0: i32) -> (i32, i32) {
    %c0_i32 = arith.constant 0 : i32
    %c0_i32_0 = arith.constant 0 : i32
    %c0_i32_1 = arith.constant 0 : i32
    return %c0_i32, %c0_i32_0 : i32, i32
  }
  func.func @transform_6(%arg0: i32) -> (i32, i32) {
    %c0_i32 = arith.constant 0 : i32
    %c0_i32_0 = arith.constant 0 : i32
    %c0_i32_1 = arith.constant 0 : i32
    return %c0_i32, %c0_i32_0 : i32, i32
  }
  func.func @transform_7(%arg0: i32) -> (i32, i32) {
    %c0_i32 = arith.constant 0 : i32
    %c0_i32_0 = arith.constant 0 : i32
    return %arg0, %c0_i32 : i32, i32
  }
}

</mosaic_0001>

<llo_original>
// kernel: classification_model_forward.1
$region0: #{classification_model_forward.1}
  #allocation0 [shape = 'u32[]', space=smem, size = 0x4, offset = 0x4, fixed_abs, tag = 'smem constant byte address 0x4 - core index']
  #allocation1 [shape = 'u32[72,128]{1,0:T(1,128)}', space=vmem, size = 0x9000, scoped, tag = 'internal scratch']
  #allocation2 [shape = 'f32[8,64]{1,0:T(8,128)}', space=vmem, size = 0x1000, scoped, tag = 'scratch operand']
  %s0 = inlined_call_operand.vmem [shape: bf16[8,32], index: 0, kind: input, shape index: {}]
  %s1 = inlined_call_operand.vmem [shape: bf16[32,64], index: 1, kind: input, shape index: {}]
  %s2 = inlined_call_operand.vmem [shape: f32[1,64], index: 2, kind: input, shape index: {}]
  %s3 = inlined_call_operand.vmem [shape: bf16[64,64], index: 3, kind: input, shape index: {}]
  %s4 = inlined_call_operand.vmem [shape: f32[1,64], index: 4, kind: input, shape index: {}]
  %s5 = inlined_call_operand.vmem [shape: bf16[64,16], index: 5, kind: input, shape index: {}]
  %s6 = inlined_call_operand.vmem [shape: f32[1,16], index: 6, kind: input, shape index: {}]
  %s7 = inlined_call_operand.hbm [shape: f32[8,16], index: 7, kind: output, shape index: {}]
  %s8 = sld [smem:[#allocation0]]
  $region38: #{classification_model_forward.1} parent=0
    _
  %s10 = ssub.s32 1, %s8
  %s11 = scalar_select 0, %s10, %s8
  $region1: #{classification_model_forward.1} parent=0
    #allocation3 [shape = 'u8[4096]{0}', space=vmem, size = 0x1000, scoped, tag = 'output window, operand 0, single buffered']
    #allocation4 [shape = 's32[1]{0}', space=sflag, size = 0x4, scoped, tag = 'scoped memory for classification_model_forward.1']
    %12 = vsyncpa [#allocation4], 0
    // Predicated region
    $region2: #{classification_model_forward.1} parent=1 // pred_check
      _
    $region3: #{classification_model_forward.1} parent=1 // pred_check_branch
      %14 = sbr.rel (0) target = $region5
    $region4: #{classification_model_forward.1} parent=1 // pred_region
      _
    $region5: #{classification_model_forward.1} parent=1 // pred_fallthru
      _
    // Predicated region
    $region6: #{classification_model_forward.1} parent=1 // pred_check
      _
    $region7: #{classification_model_forward.1} parent=1 // pred_check_branch
      %16 = sbr.rel (0) target = $region9
    $region8: #{classification_model_forward.1} parent=1 // pred_region
      _
    $region9: #{classification_model_forward.1} parent=1 // pred_fallthru
      _
    // Predicated region
    $region10: #{classification_model_forward.1} parent=1 // pred_check
      _
    $region11: #{classification_model_forward.1} parent=1 // pred_check_branch
      %18 = sbr.rel (0) target = $region13
    $region12: #{classification_model_forward.1} parent=1 // pred_region
      _
    $region13: #{classification_model_forward.1} parent=1 // pred_fallthru
      _
    // Predicated region
    $region14: #{classification_model_forward.1} parent=1 // pred_check
      _
    $region15: #{classification_model_forward.1} parent=1 // pred_check_branch
      %20 = sbr.rel (0) target = $region17
    $region16: #{classification_model_forward.1} parent=1 // pred_region
      _
    $region17: #{classification_model_forward.1} parent=1 // pred_fallthru
      _
    // Predicated region
    $region18: #{classification_model_forward.1} parent=1 // pred_check
      _
    $region19: #{classification_model_forward.1} parent=1 // pred_check_branch
      %22 = sbr.rel (0) target = $region21
    $region20: #{classification_model_forward.1} parent=1 // pred_region
      _
    $region21: #{classification_model_forward.1} parent=1 // pred_fallthru
      _
    // Predicated region
    $region22: #{classification_model_forward.1} parent=1 // pred_check
      _
    $region23: #{classification_model_forward.1} parent=1 // pred_check_branch
      %24 = sbr.rel (0) target = $region25
    $region24: #{classification_model_forward.1} parent=1 // pred_region
      _
    $region25: #{classification_model_forward.1} parent=1 // pred_fallthru
      _
    // Predicated region
    $region26: #{classification_model_forward.1} parent=1 // pred_check
      _
    $region27: #{classification_model_forward.1} parent=1 // pred_check_branch
      %26 = sbr.rel (0) target = $region29
    $region28: #{classification_model_forward.1} parent=1 // pred_region
      _
    $region29: #{classification_model_forward.1} parent=1 // pred_fallthru
      _
    %v28 = vld [vmem:[%s0] sm:$0xf]
    %v29 = vld [vmem:[%s1] sm:$0xf]
    %v30 = vld [vmem:[%s1 + $0x4] sm:$0xf]
    %v31 = vld [vmem:[%s1 + $0x8] sm:$0xf]
    %v32 = vld [vmem:[%s1 + $0xc] sm:$0xf]
    %v33 = vld [vmem:[%s2] sm:$0x1]
    %v35 = vperm.slane %v33, 0
    %v41 = vunpack.c.l.b16 %v29
    %v42 = vunpack.c.l.b16 %v30
    %v43 = vunpack.c.l.b16 %v31
    %v44 = vunpack.c.l.b16 %v32
    %v45 = vpack.c.b16 %v42, %v41
    %v46 = vpack.c.b16 %v44, %v43
    %vm49 = vcmask 261120
    %v51 = vsel %vm49, %v28, 0
    %53 = vmatpush.bf16.msra.mxu0 0
    %54 = vmatpush.bf16.msra.mxu0 0
    %55 = vmatpush.bf16.msra.mxu0 0
    %56 = vmatpush.bf16.msra.mxu0 0
    %57 = vmatpush.bf16.msra.mxu0 0
    %58 = vmatpush.bf16.msra.mxu0 0
    %59 = vmatpush.bf16.msra.mxu0 %v46
    %60 = vmatpush.bf16.msra.mxu0 %v45
    %61 = vmatmul.bf16.gmra.mxu0 %v51
    %v62 = vpop.f32.mrf.mxu0
    %v63 = vadd.f32 %v35, %v62
    %v64 = vpop.f32.mrf.mxu0
    %65 = vdwg.mxu0
    %v66 = vmax.f32 %v63, 0.0
    %vm67 = vcmask 523264
    %68 = vst.msk [vmem:[#allocation2] sm:$0xff] %vm67, %v66
    %v69 = vld [vmem:[#allocation2] sm:$0xff]
    %v70 = vpack.c.bf16 %v69, %v69
    %v71 = vld [vmem:[%s3] sm:$0xf]
    %v72 = vld [vmem:[%s3 + $0x4] sm:$0xf]
    %v73 = vld [vmem:[%s3 + $0x8] sm:$0xf]
    %v74 = vld [vmem:[%s3 + $0xc] sm:$0xf]
    %v75 = vld [vmem:[%s3 + $0x10] sm:$0xf]
    %v76 = vld [vmem:[%s3 + $0x14] sm:$0xf]
    %v77 = vld [vmem:[%s3 + $0x18] sm:$0xf]
    %v78 = vld [vmem:[%s3 + $0x1c] sm:$0xf]
    %v79 = vld [vmem:[%s4] sm:$0x1]
    %v81 = vperm.slane %v79, 0
    %v91 = vunpack.c.l.b16 %v71
    %v92 = vunpack.c.l.b16 %v72
    %v93 = vunpack.c.l.b16 %v73
    %v94 = vunpack.c.l.b16 %v74
    %v95 = vunpack.c.l.b16 %v75
    %v96 = vunpack.c.l.b16 %v76
    %v97 = vunpack.c.l.b16 %v77
    %v98 = vunpack.c.l.b16 %v78
    %v99 = vpack.c.b16 %v92, %v91
    %v100 = vpack.c.b16 %v94, %v93
    %v101 = vpack.c.b16 %v96, %v95
    %v102 = vpack.c.b16 %v98, %v97
    %v108 = vsel %vm67, %v70, 0
    %110 = vmatpush.bf16.msra.mxu0 0
    %111 = vmatpush.bf16.msra.mxu0 0
    %112 = vmatpush.bf16.msra.mxu0 0
    %113 = vmatpush.bf16.msra.mxu0 0
    %114 = vmatpush.bf16.msra.mxu0 %v102
    %115 = vmatpush.bf16.msra.mxu0 %v101
    %116 = vmatpush.bf16.msra.mxu0 %v100
    %117 = vmatpush.bf16.msra.mxu0 %v99
    %118 = vmatmul.bf16.gmra.mxu0 %v108
    %v119 = vpop.f32.mrf.mxu0
    %v120 = vadd.f32 %v81, %v119
    %v121 = vpop.f32.mrf.mxu0
    %122 = vdwg.mxu0
    %v123 = vmax.f32 %v120, 0.0
    %124 = vst.msk [vmem:[#allocation2] sm:$0xff] %vm67, %v123
    %v125 = vld [vmem:[#allocation2] sm:$0xff]
    %v126 = vpack.c.bf16 %v125, %v125
    %v127 = vld [vmem:[%s5] sm:$0xf]
    %v128 = vld [vmem:[%s5 + $0x4] sm:$0xf]
    %v129 = vld [vmem:[%s5 + $0x8] sm:$0xf]
    %v130 = vld [vmem:[%s5 + $0xc] sm:$0xf]
    %v131 = vld [vmem:[%s5 + $0x10] sm:$0xf]
    %v132 = vld [vmem:[%s5 + $0x14] sm:$0xf]
    %v133 = vld [vmem:[%s5 + $0x18] sm:$0xf]
    %v134 = vld [vmem:[%s5 + $0x1c] sm:$0xf]
    %v135 = vld [vmem:[%s6] sm:$0x1]
    %v137 = vperm.slane %v135, 0
    %v147 = vunpack.c.l.b16 %v127
    %v148 = vunpack.c.l.b16 %v128
    %v149 = vunpack.c.l.b16 %v129
    %v150 = vunpack.c.l.b16 %v130
    %v151 = vunpack.c.l.b16 %v131
    %v152 = vunpack.c.l.b16 %v132
    %v153 = vunpack.c.l.b16 %v133
    %v154 = vunpack.c.l.b16 %v134
    %v155 = vpack.c.b16 %v148, %v147
    %v156 = vpack.c.b16 %v150, %v149
    %v157 = vpack.c.b16 %v152, %v151
    %v158 = vpack.c.b16 %v154, %v153
    %v164 = vsel %vm67, %v126, 0
    %166 = vmatpush.bf16.msra.mxu0 0
    %167 = vmatpush.bf16.msra.mxu0 0
    %168 = vmatpush.bf16.msra.mxu0 0
    %169 = vmatpush.bf16.msra.mxu0 0
    %170 = vmatpush.bf16.msra.mxu0 %v158
    %171 = vmatpush.bf16.msra.mxu0 %v157
    %172 = vmatpush.bf16.msra.mxu0 %v156
    %173 = vmatpush.bf16.msra.mxu0 %v155
    %174 = vmatmul.bf16.gmra.mxu0 %v164
    %v175 = vpop.f32.mrf.mxu0
    %v176 = vadd.f32 %v137, %v175
    %v177 = vpop.f32.mrf.mxu0
    %178 = vdwg.mxu0
    %vm179 = vcmask 130048
    %180 = vst.msk [vmem:[#allocation3] sm:$0xff] %vm179, %v176
    // Predicated region
    $region30: #{classification_model_forward.1} parent=1 // pred_check
      _
    $region31: #{classification_model_forward.1} parent=1 // pred_check_branch
      %182 = sbr.rel (0) target = $region33
    $region32: #{classification_model_forward.1} parent=1 // pred_region
      %184 = vsyncadd [#allocation4], 0
      %s186 = sshll.u32 [#allocation3], 4
      %s187 = int_to_ptr.vmem [resolvable:$true] %s186
      %s188 = sshll.u32 %s7, 4
      %s189 = int_to_ptr.hbm [resolvable:$true] %s188
      %191 = dma.vmem_to_hbm [thread:$0]  %s187, 128, %s189, [#allocation4]
    $region33: #{classification_model_forward.1} parent=1 // pred_fallthru
      _
    // Predicated region
    $region34: #{classification_model_forward.1} parent=1 // pred_check
      _
    $region35: #{classification_model_forward.1} parent=1 // pred_check_branch
      %193 = sbr.rel (0) target = $region37
    $region36: #{classification_model_forward.1} parent=1 // pred_region
      %195 = dma.done [#allocation4], 128
    $region37: #{classification_model_forward.1} parent=1 // pred_fallthru
      _
    %196 = vsyncpa [#allocation4], 1

</llo_original>
